<compile_context>
chip_gen: v7x
topology: tpu7x:2x2x1
jax: 0.10.0
libtpu: 0.0.40
codegen_flags: <defaults>
</compile_context>

<pallas_src>
import jax
import jax.numpy as jnp
from jax.experimental import pallas as pl
from jax.experimental.pallas import tpu as pltpu


def _round_up(x, m):
    return (x + m - 1) // m * m


def merge_kernel(x1_ref, x2_ref, w1_ref, w2_ref, b_ref, o_ref):
    # Fused MergeTransform tile:
    #   out = x1_tile @ W1_tile + x2_tile @ W2_tile + (b1 + b2)_tile
    acc = jnp.dot(x1_ref[...], w1_ref[...], preferred_element_type=jnp.float32)
    acc = acc + jnp.dot(x2_ref[...], w2_ref[...],
                        preferred_element_type=jnp.float32)
    o_ref[...] = (acc + b_ref[...]).astype(o_ref.dtype)


def merge_transform(x1, w1, b1, x2, w2, b2, *, tm=256, tn=512):
    """MergeTransform forward with two Linear sub-transforms.

    x1: (B, D1)   w1: (D1, DOUT)   b1: (1, DOUT)
    x2: (B, D2)   w2: (D2, DOUT)   b2: (1, DOUT)
    returns (B, DOUT) in x1.dtype
    """
    B, D1 = x1.shape
    B2, D2 = x2.shape
    DOUT = w1.shape[1]
    assert B2 == B
    assert w2.shape[1] == DOUT and b1.shape == (1, DOUT) and b2.shape == (1, DOUT)
    out_dtype = x1.dtype

    # Fold the two biases once (O(DOUT), negligible); keep it f32 so it adds
    # directly onto the f32 accumulator.
    b = (b1 + b2).astype(jnp.float32)

    # --- Tile sizes: (8,128)-legal, clamped to the problem ------------------
    tm = min(tm, _round_up(B, 8))        # multiple of 8
    tn = min(tn, _round_up(DOUT, 128))   # multiple of 128
    grid = (pl.cdiv(B, tm), pl.cdiv(DOUT, tn))

    # --- Explicit VMEM budget (v7x has only 64 MiB per TC) ------------------
    ibytes = jnp.dtype(x1.dtype).itemsize
    wbytes = jnp.dtype(w1.dtype).itemsize
    obytes = jnp.dtype(out_dtype).itemsize
    # double-buffered input tiles + double-buffered output tile, plus slack
    vmem_est = 2 * (tm * (D1 + D2) * ibytes
                    + (D1 + D2) * tn * wbytes
                    + tn * 4
                    + tm * tn * obytes)
    vmem_limit = int(min(max(2 * vmem_est, 32 * 1024 * 1024), 64 * 1024 * 1024))

    cost = pl.CostEstimate(
        flops=2 * B * (D1 + D2) * DOUT,
        transcendentals=0,
        bytes_accessed=(B * (D1 + D2)) * ibytes
                       + ((D1 + D2) * DOUT) * wbytes
                       + DOUT * 4
                       + B * DOUT * obytes,
    )

    out = pl.pallas_call(
        merge_kernel,
        out_shape=jax.ShapeDtypeStruct((B, DOUT), out_dtype),
        grid_spec=pltpu.PrefetchScalarGridSpec(
            num_scalar_prefetch=0,
            grid=grid,
            in_specs=[
                pl.BlockSpec((tm, D1), lambda i, j: (i, 0)),   # x1 tile
                pl.BlockSpec((tm, D2), lambda i, j: (i, 0)),   # x2 tile
                pl.BlockSpec((D1, tn), lambda i, j: (0, j)),   # W1 tile
                pl.BlockSpec((D2, tn), lambda i, j: (0, j)),   # W2 tile
                pl.BlockSpec((1, tn), lambda i, j: (0, j)),    # fused bias tile
            ],
            out_specs=pl.BlockSpec((tm, tn), lambda i, j: (i, j)),
        ),
        compiler_params=pltpu.CompilerParams(
            dimension_semantics=("parallel", "parallel"),
            vmem_limit_bytes=vmem_limit,
        ),
        cost_estimate=cost,
    )(x1, x2, w1, w2, b)

    return out


if __name__ == "__main__":
    # Small shapes consistent with the module: two inputs with different
    # feature dims, both mapped to the same output dim and summed.
    B, D1, D2, DOUT = 8, 128, 256, 128

    key = jax.random.PRNGKey(0)
    k1, k2, k3, k4, k5, k6 = jax.random.split(key, 6)

    x1 = jax.random.normal(k1, (B, D1), dtype=jnp.float32)
    x2 = jax.random.normal(k2, (B, D2), dtype=jnp.float32)
    # Deterministic "Linear" parameters (weights stored pre-transposed).
    w1 = jax.random.normal(k3, (D1, DOUT), dtype=jnp.float32) * 0.02
    b1 = jax.random.normal(k4, (1, DOUT), dtype=jnp.float32) * 0.1
    w2 = jax.random.normal(k5, (D2, DOUT), dtype=jnp.float32) * 0.02
    b2 = jax.random.normal(k6, (1, DOUT), dtype=jnp.float32) * 0.1

    out = merge_transform(x1, w1, b1, x2, w2, b2)
    out = jax.block_until_ready(out)

    # Pure-JAX reference of MergeTransform with two Linear sub-transforms.
    ref = (x1 @ w1 + b1) + (x2 @ w2 + b2)
    assert out.shape == (B, DOUT)
    assert jnp.allclose(out, ref, atol=1e-2, rtol=1e-2)

    print("KERNEL_OK")
</pallas_src>

<mosaic_0001>
module attributes {stable_mosaic.version = 11 : i64} {
  func.func @merge_kernel(%arg0: i32, %arg1: i32, %arg2: memref<8x128xf32, #tpu.memory_space<vmem>>, %arg3: memref<8x256xf32, #tpu.memory_space<vmem>>, %arg4: memref<128x128xf32, #tpu.memory_space<vmem>>, %arg5: memref<256x128xf32, #tpu.memory_space<vmem>>, %arg6: memref<1x128xf32, #tpu.memory_space<vmem>>, %arg7: memref<8x128xf32, #tpu.memory_space<vmem>>) attributes {dimension_semantics = [#tpu.dimension_semantics<parallel>, #tpu.dimension_semantics<parallel>], iteration_bounds = array<i64: 1, 1>, scalar_prefetch = 0 : i64, scratch_operands = 0 : i64, tpu.core_type = #tpu.core_type<tc>, window_params = [{transform_indices = @transform_0, window_bounds = array<i64: 8, 128>}, {transform_indices = @transform_1, window_bounds = array<i64: 8, 256>}, {transform_indices = @transform_2, window_bounds = array<i64: 128, 128>}, {transform_indices = @transform_3, window_bounds = array<i64: 256, 128>}, {transform_indices = @transform_4, window_bounds = array<i64: 1, 128>}, {transform_indices = @transform_5, window_bounds = array<i64: 8, 128>}]} {
    %c0 = arith.constant 0 : index
    %c0_0 = arith.constant 0 : index
    %0 = vector.load %arg2[%c0, %c0_0] : memref<8x128xf32, #tpu.memory_space<vmem>>, vector<8x128xf32>
    %c0_1 = arith.constant 0 : index
    %c0_2 = arith.constant 0 : index
    %1 = vector.load %arg4[%c0_1, %c0_2] : memref<128x128xf32, #tpu.memory_space<vmem>>, vector<128x128xf32>
    %cst = arith.constant dense<0.000000e+00> : vector<8x128xf32>
    %2 = tpu.matmul %0, %1, %cst {dimension_numbers = #tpu.dot_dimension_numbers<[1], [0], [0], [1], [0, 0, 1, 1], [], []>} : vector<8x128xf32>, vector<128x128xf32>, vector<8x128xf32> -> vector<8x128xf32>
    %c0_3 = arith.constant 0 : index
    %c0_4 = arith.constant 0 : index
    %3 = vector.load %arg3[%c0_3, %c0_4] : memref<8x256xf32, #tpu.memory_space<vmem>>, vector<8x256xf32>
    %c0_5 = arith.constant 0 : index
    %c0_6 = arith.constant 0 : index
    %4 = vector.load %arg5[%c0_5, %c0_6] : memref<256x128xf32, #tpu.memory_space<vmem>>, vector<256x128xf32>
    %cst_7 = arith.constant dense<0.000000e+00> : vector<8x128xf32>
    %5 = tpu.matmul %3, %4, %cst_7 {dimension_numbers = #tpu.dot_dimension_numbers<[1], [0], [0], [1], [0, 0, 1, 1], [], []>} : vector<8x256xf32>, vector<256x128xf32>, vector<8x128xf32> -> vector<8x128xf32>
    %6 = arith.addf %2, %5 : vector<8x128xf32>
    %c0_8 = arith.constant 0 : index
    %c0_9 = arith.constant 0 : index
    %7 = vector.load %arg6[%c0_8, %c0_9] : memref<1x128xf32, #tpu.memory_space<vmem>>, vector<1x128xf32>
    %8 = vector.broadcast %7 : vector<1x128xf32> to vector<8x128xf32>
    %9 = arith.addf %6, %8 : vector<8x128xf32>
    %c0_10 = arith.constant 0 : index
    %c0_11 = arith.constant 0 : index
    %10 = vector.load %arg7[%c0_10, %c0_11] : memref<8x128xf32, #tpu.memory_space<vmem>>, vector<8x128xf32>
    tpu.vector_store %arg7[%c0_10, %c0_11], %9 {strides = array<i32>} : memref<8x128xf32, #tpu.memory_space<vmem>>, vector<8x128xf32>,
    return
  }
  func.func @transform_0(%arg0: i32, %arg1: i32) -> (i32, i32) {
    %c0_i32 = arith.constant 0 : i32
    %c0_i32_0 = arith.constant 0 : i32
    return %arg0, %c0_i32 : i32, i32
  }
  func.func @transform_1(%arg0: i32, %arg1: i32) -> (i32, i32) {
    %c0_i32 = arith.constant 0 : i32
    %c0_i32_0 = arith.constant 0 : i32
    return %arg0, %c0_i32 : i32, i32
  }
  func.func @transform_2(%arg0: i32, %arg1: i32) -> (i32, i32) {
    %c0_i32 = arith.constant 0 : i32
    %c0_i32_0 = arith.constant 0 : i32
    return %c0_i32, %arg1 : i32, i32
  }
  func.func @transform_3(%arg0: i32, %arg1: i32) -> (i32, i32) {
    %c0_i32 = arith.constant 0 : i32
    %c0_i32_0 = arith.constant 0 : i32
    return %c0_i32, %arg1 : i32, i32
  }
  func.func @transform_4(%arg0: i32, %arg1: i32) -> (i32, i32) {
    %c0_i32 = arith.constant 0 : i32
    %c0_i32_0 = arith.constant 0 : i32
    return %c0_i32, %arg1 : i32, i32
  }
  func.func @transform_5(%arg0: i32, %arg1: i32) -> (i32, i32) {
    %c0_i32 = arith.constant 0 : i32
    return %arg0, %arg1 : i32, i32
  }
}

</mosaic_0001>

<llo_original>
// kernel: tpu_custom_call.1
$region0: #{tpu_custom_call.1}
  #allocation0 [shape = 'u32[]', space=smem, size = 0x4, offset = 0x4, fixed_abs, tag = 'smem constant byte address 0x4 - core index']
  #allocation1 [shape = 'u32[144,128]{1,0:T(1,128)}', space=vmem, size = 0x12000, scoped, tag = 'internal scratch']
  %s0 = inlined_call_operand.hbm [shape: f32[8,128], index: 0, kind: input, shape index: {}]
  %s1 = inlined_call_operand.hbm [shape: f32[8,256], index: 1, kind: input, shape index: {}]
  %s2 = inlined_call_operand.hbm [shape: f32[128,128], index: 2, kind: input, shape index: {}]
  %s3 = inlined_call_operand.hbm [shape: f32[256,128], index: 3, kind: input, shape index: {}]
  %s4 = inlined_call_operand.vmem [shape: f32[1,128], index: 4, kind: input, shape index: {}]
  %s5 = inlined_call_operand.hbm [shape: f32[8,128], index: 5, kind: output, shape index: {}]
  %s6 = sld [smem:[#allocation0]]
  $region46: #{tpu_custom_call.1} parent=0
    _
  %s8 = ssub.s32 1, %s6
  %s9 = scalar_select 0, %s8, %s6
  $region1: #{tpu_custom_call.1} parent=0
    #allocation2 [shape = 'u8[4096]{0}', space=vmem, size = 0x1000, scoped, tag = 'input window, operand 0, single buffered']
    #allocation3 [shape = 's32[1]{0}', space=sflag, size = 0x4, scoped, tag = 'scoped memory for tpu_custom_call.1']
    #allocation4 [shape = 's32[1]{0}', space=sflag, size = 0x4, scoped, tag = 'scoped memory for tpu_custom_call.1']
    #allocation5 [shape = 'u8[8192]{0}', space=vmem, size = 0x2000, scoped, tag = 'input window, operand 1, single buffered']
    #allocation6 [shape = 's32[1]{0}', space=sflag, size = 0x4, scoped, tag = 'scoped memory for tpu_custom_call.1']
    #allocation7 [shape = 'u8[65536]{0}', space=vmem, size = 0x10000, scoped, tag = 'input window, operand 2, single buffered']
    #allocation8 [shape = 'u8[131072]{0}', space=vmem, size = 0x20000, scoped, tag = 'input window, operand 3, single buffered']
    #allocation9 [shape = 's32[1]{0}', space=sflag, size = 0x4, scoped, tag = 'scoped memory for tpu_custom_call.1']
    #allocation10 [shape = 'u8[4096]{0}', space=vmem, size = 0x1000, scoped, tag = 'output window, operand 0, single buffered']
    %10 = vsyncpa [#allocation3], 0
    %11 = vsyncpa [#allocation6], 0
    %12 = vsyncpa [#allocation9], 0
    %13 = vsyncpa [#allocation4], 0
    // Predicated region
    $region2: #{tpu_custom_call.1} parent=1 // pred_check
      _
    $region3: #{tpu_custom_call.1} parent=1 // pred_check_branch
      %15 = sbr.rel (0) target = $region5
    $region4: #{tpu_custom_call.1} parent=1 // pred_region
      %s17 = ssub.s32 128, 128
      %18 = vsyncadd [#allocation3], %s17
      %s20 = sshll.u32 [#allocation2], 4
      %s21 = int_to_ptr.vmem [resolvable:$true] %s20
      %23 = dma.hbm_to_vmem [thread:$0]  %s0, 128, %s21, [#allocation3]
    $region5: #{tpu_custom_call.1} parent=1 // pred_fallthru
      _
    // Predicated region
    $region6: #{tpu_custom_call.1} parent=1 // pred_check
      _
    $region7: #{tpu_custom_call.1} parent=1 // pred_check_branch
      %25 = sbr.rel (0) target = $region9
    $region8: #{tpu_custom_call.1} parent=1 // pred_region
      %s27 = ssub.s32 256, 256
      %28 = vsyncadd [#allocation6], %s27
      %s30 = sshll.u32 [#allocation5], 4
      %s31 = int_to_ptr.vmem [resolvable:$true] %s30
      %33 = dma.hbm_to_vmem [thread:$0]  %s1, 256, %s31, [#allocation6]
    $region9: #{tpu_custom_call.1} parent=1 // pred_fallthru
      _
    // Predicated region
    $region10: #{tpu_custom_call.1} parent=1 // pred_check
      _
    $region11: #{tpu_custom_call.1} parent=1 // pred_check_branch
      %35 = sbr.rel (0) target = $region13
    $region12: #{tpu_custom_call.1} parent=1 // pred_region
      %s37 = ssub.s32 2048, 2048
      %38 = vsyncadd [#allocation6], %s37
      %s39 = sshll.u32 [#allocation7], 4
      %s40 = int_to_ptr.vmem [resolvable:$true] %s39
      %45 = dma.hbm_to_vmem [thread:$0]  %s2, 2048, %s40, [#allocation6], 128, 128, 8
    $region13: #{tpu_custom_call.1} parent=1 // pred_fallthru
      _
    // Predicated region
    $region14: #{tpu_custom_call.1} parent=1 // pred_check
      _
    $region15: #{tpu_custom_call.1} parent=1 // pred_check_branch
      %47 = sbr.rel (0) target = $region17
    $region16: #{tpu_custom_call.1} parent=1 // pred_region
      %s49 = ssub.s32 4096, 4096
      %50 = vsyncadd [#allocation9], %s49
      %s51 = sshll.u32 [#allocation8], 4
      %s52 = int_to_ptr.vmem [resolvable:$true] %s51
      %57 = dma.hbm_to_vmem [thread:$0]  %s3, 4096, %s52, [#allocation9], 128, 128, 8
    $region17: #{tpu_custom_call.1} parent=1 // pred_fallthru
      _
    // Predicated region
    $region18: #{tpu_custom_call.1} parent=1 // pred_check
      _
    $region19: #{tpu_custom_call.1} parent=1 // pred_check_branch
      %59 = sbr.rel (0) target = $region21
    $region20: #{tpu_custom_call.1} parent=1 // pred_region
      _
    $region21: #{tpu_custom_call.1} parent=1 // pred_fallthru
      _
    // Predicated region
    $region22: #{tpu_custom_call.1} parent=1 // pred_check
      _
    $region23: #{tpu_custom_call.1} parent=1 // pred_check_branch
      %61 = sbr.rel (0) target = $region25
    $region24: #{tpu_custom_call.1} parent=1 // pred_region
      %62 = dma.done [#allocation3], 128
    $region25: #{tpu_custom_call.1} parent=1 // pred_fallthru
      _
    // Predicated region
    $region26: #{tpu_custom_call.1} parent=1 // pred_check
      _
    $region27: #{tpu_custom_call.1} parent=1 // pred_check_branch
      %64 = sbr.rel (0) target = $region29
    $region28: #{tpu_custom_call.1} parent=1 // pred_region
      %65 = dma.done [#allocation6], 256
    $region29: #{tpu_custom_call.1} parent=1 // pred_fallthru
      _
    // Predicated region
    $region30: #{tpu_custom_call.1} parent=1 // pred_check
      _
    $region31: #{tpu_custom_call.1} parent=1 // pred_check_branch
      %67 = sbr.rel (0) target = $region33
    $region32: #{tpu_custom_call.1} parent=1 // pred_region
      %68 = dma.done [#allocation6], 2048
    $region33: #{tpu_custom_call.1} parent=1 // pred_fallthru
      _
    // Predicated region
    $region34: #{tpu_custom_call.1} parent=1 // pred_check
      _
    $region35: #{tpu_custom_call.1} parent=1 // pred_check_branch
      %70 = sbr.rel (0) target = $region37
    $region36: #{tpu_custom_call.1} parent=1 // pred_region
      %71 = dma.done [#allocation9], 4096
    $region37: #{tpu_custom_call.1} parent=1 // pred_fallthru
      _
    %v72 = vld [vmem:[#allocation2] sm:$0xff]
    %v73 = vld [vmem:[#allocation7] sm:$0xff]
    %v74 = vld [vmem:[#allocation7 + $0x8] sm:$0xff]
    %v75 = vld [vmem:[#allocation7 + $0x10] sm:$0xff]
    %v76 = vld [vmem:[#allocation7 + $0x18] sm:$0xff]
    %v77 = vld [vmem:[#allocation7 + $0x20] sm:$0xff]
    %v78 = vld [vmem:[#allocation7 + $0x28] sm:$0xff]
    %v79 = vld [vmem:[#allocation7 + $0x30] sm:$0xff]
    %v80 = vld [vmem:[#allocation7 + $0x38] sm:$0xff]
    %v81 = vld [vmem:[#allocation7 + $0x40] sm:$0xff]
    %v82 = vld [vmem:[#allocation7 + $0x48] sm:$0xff]
    %v83 = vld [vmem:[#allocation7 + $0x50] sm:$0xff]
    %v84 = vld [vmem:[#allocation7 + $0x58] sm:$0xff]
    %v85 = vld [vmem:[#allocation7 + $0x60] sm:$0xff]
    %v86 = vld [vmem:[#allocation7 + $0x68] sm:$0xff]
    %v87 = vld [vmem:[#allocation7 + $0x70] sm:$0xff]
    %v88 = vld [vmem:[#allocation7 + $0x78] sm:$0xff]
    %v89 = vld [vmem:[#allocation5] sm:$0xff]
    %v90 = vld [vmem:[#allocation5 + $0x8] sm:$0xff]
    %v91 = vld [vmem:[#allocation8] sm:$0xff]
    %v92 = vld [vmem:[#allocation8 + $0x8] sm:$0xff]
    %v93 = vld [vmem:[#allocation8 + $0x10] sm:$0xff]
    %v94 = vld [vmem:[#allocation8 + $0x18] sm:$0xff]
    %v95 = vld [vmem:[#allocation8 + $0x20] sm:$0xff]
    %v96 = vld [vmem:[#allocation8 + $0x28] sm:$0xff]
    %v97 = vld [vmem:[#allocation8 + $0x30] sm:$0xff]
    %v98 = vld [vmem:[#allocation8 + $0x38] sm:$0xff]
    %v99 = vld [vmem:[#allocation8 + $0x40] sm:$0xff]
    %v100 = vld [vmem:[#allocation8 + $0x48] sm:$0xff]
    %v101 = vld [vmem:[#allocation8 + $0x50] sm:$0xff]
    %v102 = vld [vmem:[#allocation8 + $0x58] sm:$0xff]
    %v103 = vld [vmem:[#allocation8 + $0x60] sm:$0xff]
    %v104 = vld [vmem:[#allocation8 + $0x68] sm:$0xff]
    %v105 = vld [vmem:[#allocation8 + $0x70] sm:$0xff]
    %v106 = vld [vmem:[#allocation8 + $0x78] sm:$0xff]
    %v107 = vld [vmem:[#allocation8 + $0x80] sm:$0xff]
    %v108 = vld [vmem:[#allocation8 + $0x88] sm:$0xff]
    %v109 = vld [vmem:[#allocation8 + $0x90] sm:$0xff]
    %v110 = vld [vmem:[#allocation8 + $0x98] sm:$0xff]
    %v111 = vld [vmem:[#allocation8 + $0xa0] sm:$0xff]
    %v112 = vld [vmem:[#allocation8 + $0xa8] sm:$0xff]
    %v113 = vld [vmem:[#allocation8 + $0xb0] sm:$0xff]
    %v114 = vld [vmem:[#allocation8 + $0xb8] sm:$0xff]
    %v115 = vld [vmem:[#allocation8 + $0xc0] sm:$0xff]
    %v116 = vld [vmem:[#allocation8 + $0xc8] sm:$0xff]
    %v117 = vld [vmem:[#allocation8 + $0xd0] sm:$0xff]
    %v118 = vld [vmem:[#allocation8 + $0xd8] sm:$0xff]
    %v119 = vld [vmem:[#allocation8 + $0xe0] sm:$0xff]
    %v120 = vld [vmem:[#allocation8 + $0xe8] sm:$0xff]
    %v121 = vld [vmem:[#allocation8 + $0xf0] sm:$0xff]
    %v122 = vld [vmem:[#allocation8 + $0xf8] sm:$0xff]
    %123 = vmatprep.subr.mxu0 0.0
    %124 = vmatpush1.msra.mxu0 %v91
    %125 = vmatprep.subr.mxu0 0.0
    %126 = vmatpush1.msra.mxu0 %v92
    %127 = vmatprep.subr.mxu0 0.0
    %128 = vmatpush1.msra.mxu0 %v93
    %129 = vmatprep.subr.mxu0 0.0
    %130 = vmatpush1.msra.mxu0 %v94
    %131 = vmatprep.subr.mxu0 0.0
    %132 = vmatpush1.msra.mxu0 %v95
    %133 = vmatprep.subr.mxu0 0.0
    %134 = vmatpush1.msra.mxu0 %v96
    %135 = vmatprep.subr.mxu0 0.0
    %136 = vmatpush1.msra.mxu0 %v97
    %137 = vmatprep.subr.mxu0 0.0
    %138 = vmatpush1.msra.mxu0 %v98
    %139 = vmatprep.subr.mxu0 0.0
    %140 = vmatpush1.msra.mxu0 %v99
    %141 = vmatprep.subr.mxu0 0.0
    %142 = vmatpush1.msra.mxu0 %v100
    %143 = vmatprep.subr.mxu0 0.0
    %144 = vmatpush1.msra.mxu0 %v101
    %145 = vmatprep.subr.mxu0 0.0
    %146 = vmatpush1.msra.mxu0 %v102
    %147 = vmatprep.subr.mxu0 0.0
    %148 = vmatpush1.msra.mxu0 %v103
    %149 = vmatprep.subr.mxu0 0.0
    %150 = vmatpush1.msra.mxu0 %v104
    %151 = vmatprep.subr.mxu0 0.0
    %152 = vmatpush1.msra.mxu0 %v105
    %153 = vmatprep.subr.mxu0 0.0
    %154 = vmatpush1.msra.mxu0 %v106
    %155 = vmatprep.subr.mxu0 0.0
    %156 = vmatpush1.msra.mxu0 %v107
    %157 = vmatprep.subr.mxu0 0.0
    %158 = vmatpush1.msra.mxu0 %v108
    %159 = vmatprep.subr.mxu0 0.0
    %160 = vmatpush1.msra.mxu0 %v109
    %161 = vmatprep.subr.mxu0 0.0
    %162 = vmatpush1.msra.mxu0 %v110
    %163 = vmatprep.subr.mxu0 0.0
    %164 = vmatpush1.msra.mxu0 %v111
    %165 = vmatprep.subr.mxu0 0.0
    %166 = vmatpush1.msra.mxu0 %v112
    %167 = vmatprep.subr.mxu0 0.0
    %168 = vmatpush1.msra.mxu0 %v113
    %169 = vmatprep.subr.mxu0 0.0
    %170 = vmatpush1.msra.mxu0 %v114
    %171 = vmatprep.subr.mxu0 0.0
    %172 = vmatpush1.msra.mxu0 %v115
    %173 = vmatprep.subr.mxu0 0.0
    %174 = vmatpush1.msra.mxu0 %v116
    %175 = vmatprep.subr.mxu0 0.0
    %176 = vmatpush1.msra.mxu0 %v117
    %177 = vmatprep.subr.mxu0 0.0
    %178 = vmatpush1.msra.mxu0 %v118
    %179 = vmatprep.subr.mxu0 0.0
    %180 = vmatpush1.msra.mxu0 %v119
    %181 = vmatprep.subr.mxu0 0.0
    %182 = vmatpush1.msra.mxu0 %v120
    %183 = vmatprep.subr.mxu0 0.0
    %184 = vmatpush1.msra.mxu0 %v121
    %185 = vmatprep.subr.mxu0 0.0
    %186 = vmatpush1.msra.mxu0 %v122
    %187 = vmatprep.mubr.f32.mxu0 %v90
    %188 = vmatmul.mubr.f32.gmra.mrb[0].mxu0 %v89
    %v189 = vpop.f32.mrb[0].mxu0
    %v190 = vadd.f32 0.0, %v189
    %v191 = vpop.f32.mrb[0].mxu0
    %192 = vdwg.mxu0
    %193 = vmatprep.subr.mxu0 0.0
    %194 = vmatpush1.msra.mxu0 %v73
    %195 = vmatprep.subr.mxu0 0.0
    %196 = vmatpush1.msra.mxu0 %v74
    %197 = vmatprep.subr.mxu0 0.0
    %198 = vmatpush1.msra.mxu0 %v75
    %199 = vmatprep.subr.mxu0 0.0
    %200 = vmatpush1.msra.mxu0 %v76
    %201 = vmatprep.subr.mxu0 0.0
    %202 = vmatpush1.msra.mxu0 %v77
    %203 = vmatprep.subr.mxu0 0.0
    %204 = vmatpush1.msra.mxu0 %v78
    %205 = vmatprep.subr.mxu0 0.0
    %206 = vmatpush1.msra.mxu0 %v79
    %207 = vmatprep.subr.mxu0 0.0
    %208 = vmatpush1.msra.mxu0 %v80
    %209 = vmatprep.subr.mxu0 0.0
    %210 = vmatpush1.msra.mxu0 %v81
    %211 = vmatprep.subr.mxu0 0.0
    %212 = vmatpush1.msra.mxu0 %v82
    %213 = vmatprep.subr.mxu0 0.0
    %214 = vmatpush1.msra.mxu0 %v83
    %215 = vmatprep.subr.mxu0 0.0
    %216 = vmatpush1.msra.mxu0 %v84
    %217 = vmatprep.subr.mxu0 0.0
    %218 = vmatpush1.msra.mxu0 %v85
    %219 = vmatprep.subr.mxu0 0.0
    %220 = vmatpush1.msra.mxu0 %v86
    %221 = vmatprep.subr.mxu0 0.0
    %222 = vmatpush1.msra.mxu0 %v87
    %223 = vmatprep.subr.mxu0 0.0
    %224 = vmatpush1.msra.mxu0 %v88
    %225 = vmatprep.subr.mxu0 0.0
    %226 = vmatpush1.msra.mxu0 0.0
    %227 = vmatprep.subr.mxu0 0.0
    %228 = vmatpush1.msra.mxu0 0.0
    %229 = vmatprep.subr.mxu0 0.0
    %230 = vmatpush1.msra.mxu0 0.0
    %231 = vmatprep.subr.mxu0 0.0
    %232 = vmatpush1.msra.mxu0 0.0
    %233 = vmatprep.subr.mxu0 0.0
    %234 = vmatpush1.msra.mxu0 0.0
    %235 = vmatprep.subr.mxu0 0.0
    %236 = vmatpush1.msra.mxu0 0.0
    %237 = vmatprep.subr.mxu0 0.0
    %238 = vmatpush1.msra.mxu0 0.0
    %239 = vmatprep.subr.mxu0 0.0
    %240 = vmatpush1.msra.mxu0 0.0
    %241 = vmatprep.subr.mxu0 0.0
    %242 = vmatpush1.msra.mxu0 0.0
    %243 = vmatprep.subr.mxu0 0.0
    %244 = vmatpush1.msra.mxu0 0.0
    %245 = vmatprep.subr.mxu0 0.0
    %246 = vmatpush1.msra.mxu0 0.0
    %247 = vmatprep.subr.mxu0 0.0
    %248 = vmatpush1.msra.mxu0 0.0
    %249 = vmatprep.subr.mxu0 0.0
    %250 = vmatpush1.msra.mxu0 0.0
    %251 = vmatprep.subr.mxu0 0.0
    %252 = vmatpush1.msra.mxu0 0.0
    %253 = vmatprep.subr.mxu0 0.0
    %254 = vmatpush1.msra.mxu0 0.0
    %255 = vmatprep.subr.mxu0 0.0
    %256 = vmatpush1.msra.mxu0 0.0
    %257 = vmatprep.mubr.f32.mxu0 0.0
    %258 = vmatmul.mubr.f32.gmra.mrb[0].mxu0 %v72
    %v259 = vpop.f32.mrb[0].mxu0
    %v260 = vadd.f32 %v190, %v259
    %v261 = vpop.f32.mrb[0].mxu0
    %262 = vdwg.mxu0
    %v263 = vld [vmem:[%s4] sm:$0x1]
    %v265 = vlaneseq
    %v266 = vshrl.u32 %v265, 7
    %v267 = vsub.s32 0, %v266
    %v268 = vrot.slane %v263, %v267
    %v270 = vadd.f32 %v260, %v268
    %271 = vst [vmem:[#allocation10] sm:$0xff] %v270
    // Predicated region
    $region38: #{tpu_custom_call.1} parent=1 // pred_check
      _
    $region39: #{tpu_custom_call.1} parent=1 // pred_check_branch
      %273 = sbr.rel (0) target = $region41
    $region40: #{tpu_custom_call.1} parent=1 // pred_region
      %s275 = ssub.s32 128, 128
      %276 = vsyncadd [#allocation4], %s275
      %s278 = sshll.u32 [#allocation10], 4
      %s279 = int_to_ptr.vmem [resolvable:$true] %s278
      %281 = dma.vmem_to_hbm [thread:$0]  %s279, 128, %s5, [#allocation4]
    $region41: #{tpu_custom_call.1} parent=1 // pred_fallthru
      _
    // Predicated region
    $region42: #{tpu_custom_call.1} parent=1 // pred_check
      _
    $region43: #{tpu_custom_call.1} parent=1 // pred_check_branch
      %283 = sbr.rel (0) target = $region45
    $region44: #{tpu_custom_call.1} parent=1 // pred_region
      %284 = dma.done [#allocation4], 128
    $region45: #{tpu_custom_call.1} parent=1 // pred_fallthru
      _
    %285 = vsyncpa [#allocation3], 1
    %286 = vsyncpa [#allocation6], 1
    %287 = vsyncpa [#allocation9], 1
    %288 = vsyncpa [#allocation4], 1

</llo_original>
